<compile_context>
chip_gen: v6e
topology: v6e:2x2x1
jax: 0.10.0
libtpu: 0.0.40
codegen_flags: <defaults>
</compile_context>

<pallas_src>
import jax
import jax.numpy as jnp
from jax.experimental import pallas as pl
from jax.experimental.pallas import tpu as pltpu

IN_FEATURES = 32 * 32   # 1024
NUM_CLASSES = 10
PAD_N = 128             # lane-dense padded class dimension
NEG_BIG = -1e30         # mask value for padded classes (finite, avoids inf-inf)


def _round_up(n, m):
    return ((n + m - 1) // m) * m


def _quantized_logistic_kernel(x_ref, w_ref, o_ref):
    # x_ref: (TB, 1024) f32 raw input rows (read straight from HBM, no wrapper
    #        cast/pad passes)
    # w_ref: (1024, 128) bf16, pre-transposed / zero-padded, resident
    # o_ref: (TB, 128) f32 lane-dense output block
    x = x_ref[...]

    # hard_tanh == sign binarization (x == 0 -> +1), then feed the MXU bf16.
    # (Selecting bf16 constants directly off the f32 compare would drop one cast
    # pass; the compare+select+cast here is already fully hidden under the tile
    # DMA so we keep the well-trodden f32-select + truncate lowering.)
    xb = jnp.where(x < 0.0, -1.0, 1.0).astype(jnp.bfloat16)

    # (TB, 1024) bf16 @ (1024, 128) bf16 -> (TB, 128) f32 accumulation on MXU
    logits = jnp.dot(xb, w_ref[...], preferred_element_type=jnp.float32)

    # mask the padded classes (columns >= 10) before the softmax reduction
    col = jax.lax.broadcasted_iota(jnp.int32, logits.shape, 1)
    logits = jnp.where(col < NUM_CLASSES, logits, NEG_BIG)

    # numerically stable log_softmax over the class axis (cheap 128-lane XLU
    # reduction, hidden under the DMA; kept for arbitrary weight magnitudes)
    m = jnp.max(logits, axis=-1, keepdims=True)
    shifted = logits - m
    lse = jnp.log(jnp.sum(jnp.exp(shifted), axis=-1, keepdims=True))
    o_ref[...] = shifted - lse


def quantized_logistic_forward(x, weight, quantize_weights=False, block_b=1024):
    """x: (B, 1, 32, 32) or any shape flattening to (B, 1024); weight: (10, 1024)."""
    x2d = x.reshape(-1, IN_FEATURES)
    if x2d.dtype not in (jnp.float32, jnp.bfloat16):
        x2d = x2d.astype(jnp.float32)
    B = x2d.shape[0]

    # Weight prep (tiny, 10x1024): optional binarization, transpose to (K, N),
    # zero-pad the class dim to a lane-dense 128, stage as bf16 for MXU rate.
    # Padded columns are all-zero -> logits 0, masked to NEG_BIG in-kernel.
    w = weight.astype(jnp.float32)
    if quantize_weights:
        w = jnp.where(w < 0.0, -1.0, 1.0)   # hard_tanh on weights (exact +-1 in bf16)
    w_t = (jnp.zeros((IN_FEATURES, PAD_N), jnp.bfloat16)
           .at[:, :NUM_CLASSES].set(w.T.astype(jnp.bfloat16)))

    # Batch tile: big enough to amortize the ~0.35 us per-grid-step overhead,
    # small enough for VMEM (f32 x tile + bf16 weight + f32 out, double-buffered
    # ~9.5 MiB at tb=1024), and split so the grid has >= 2 steps when B allows it
    # (lets the "parallel" axis shard across v7x's two TensorCores). No batch
    # padding: Pallas clips the ragged last block.
    half = _round_up(pl.cdiv(B, 2), 8)
    tb = max(8, min(block_b, half))
    grid_b = pl.cdiv(B, tb)

    out = pl.pallas_call(
        _quantized_logistic_kernel,
        out_shape=jax.ShapeDtypeStruct((B, PAD_N), jnp.float32),
        grid=(grid_b,),
        in_specs=[
            pl.BlockSpec((tb, IN_FEATURES), lambda i: (i, 0)),
            pl.BlockSpec((IN_FEATURES, PAD_N), lambda i: (0, 0)),  # resident weight
        ],
        out_specs=pl.BlockSpec((tb, PAD_N), lambda i: (i, 0)),
        compiler_params=pltpu.CompilerParams(
            dimension_semantics=("parallel",)),   # megacore-shardable batch axis
    )(x2d, w_t)

    # TODO(synk): if the consumer tolerates the padded (B, 128) layout, skip this
    # column slice to avoid the extra output-side HBM pass / XLA launch.
    return out[:, :NUM_CLASSES]


def init_weight(key):
    # matches: self.weight.data.uniform_(-1/32, 1/32), shape (10, 32*32)
    return jax.random.uniform(
        key, (NUM_CLASSES, IN_FEATURES), dtype=jnp.float32,
        minval=-1.0 / 32.0, maxval=1.0 / 32.0)


def _reference(x, weight, quantize_weights=False):
    # pure-JAX (f32) reference for correctness checking
    x2d = x.reshape(-1, IN_FEATURES).astype(jnp.float32)
    xb = jnp.where(x2d < 0.0, -1.0, 1.0)
    w = weight.astype(jnp.float32)
    if quantize_weights:
        w = jnp.where(w < 0.0, -1.0, 1.0)
    logits = xb @ w.T
    return jax.nn.log_softmax(logits, axis=-1)


if __name__ == "__main__":
    key = jax.random.PRNGKey(0)
    k_x, k_w, k_x2 = jax.random.split(key, 3)

    weight = init_weight(k_w)

    # small batch, NCHW input consistent with the 32*32 flatten in forward()
    x = jax.random.normal(k_x, (2, 1, 32, 32), dtype=jnp.float32)

    out = jax.block_until_ready(
        quantized_logistic_forward(x, weight, quantize_weights=False))
    assert out.shape == (2, NUM_CLASSES)
    # log_softmax rows should exp-sum to 1
    assert jnp.allclose(jnp.sum(jnp.exp(out), axis=-1), 1.0, atol=1e-5)
    # bf16-staged weights add ~1e-3-scale rounding vs the f32 reference
    ref = _reference(x, weight, quantize_weights=False)
    assert jnp.allclose(out, ref, atol=1e-2, rtol=1e-2), float(jnp.max(jnp.abs(out - ref)))

    # quantize_weights=True path: +-1 weights are exact in bf16, so tighter check
    out_q = jax.block_until_ready(
        quantized_logistic_forward(x, weight, quantize_weights=True))
    ref_q = _reference(x, weight, quantize_weights=True)
    assert jnp.allclose(out_q, ref_q, atol=1e-3, rtol=1e-3)

    # exercise the multi-tile grid + ragged last block path (tb=16, grid=2,
    # last block only 4 valid rows)
    x_big = jax.random.normal(k_x2, (20, 1, 32, 32), dtype=jnp.float32)
    out_big = jax.block_until_ready(
        quantized_logistic_forward(x_big, weight, quantize_weights=False, block_b=16))
    ref_big = _reference(x_big, weight, quantize_weights=False)
    assert out_big.shape == (20, NUM_CLASSES)
    assert jnp.allclose(out_big, ref_big, atol=1e-2, rtol=1e-2)

    print("KERNEL_OK")
</pallas_src>

<mosaic_0001>
module attributes {stable_mosaic.version = 11 : i64} {
  func.func @_quantized_logistic_kernel(%arg0: i32, %arg1: memref<8x1024xf32, #tpu.memory_space<vmem>>, %arg2: memref<1024x128xbf16, #tpu.memory_space<vmem>>, %arg3: memref<8x128xf32, #tpu.memory_space<vmem>>) attributes {dimension_semantics = [#tpu.dimension_semantics<parallel>], iteration_bounds = array<i64: 1>, scalar_prefetch = 0 : i64, scratch_operands = 0 : i64, tpu.core_type = #tpu.core_type<tc>, window_params = [{transform_indices = @transform_0, window_bounds = array<i64: 8, 1024>}, {pipeline_mode = #tpu.pipeline_mode<synchronous>, transform_indices = @transform_1, window_bounds = array<i64: 1024, 128>}, {transform_indices = @transform_2, window_bounds = array<i64: 8, 128>}]} {
    %c0 = arith.constant 0 : index
    %c0_0 = arith.constant 0 : index
    %0 = vector.load %arg1[%c0, %c0_0] : memref<8x1024xf32, #tpu.memory_space<vmem>>, vector<8x1024xf32>
    %cst = arith.constant 0.000000e+00 : f32
    %1 = vector.broadcast %cst : f32 to vector<8x1024xf32>
    %2 = arith.cmpf olt, %0, %1 : vector<8x1024xf32>
    %cst_1 = arith.constant -1.000000e+00 : f32
    %cst_2 = arith.constant 1.000000e+00 : f32
    %3 = vector.broadcast %cst_1 : f32 to vector<8x1024xf32>
    %4 = vector.broadcast %cst_2 : f32 to vector<8x1024xf32>
    %5 = arith.select %2, %3, %4 : vector<8x1024xi1>, vector<8x1024xf32>
    %6 = arith.truncf %5 : vector<8x1024xf32> to vector<8x1024xbf16>
    %c0_3 = arith.constant 0 : index
    %c0_4 = arith.constant 0 : index
    %7 = vector.load %arg2[%c0_3, %c0_4] : memref<1024x128xbf16, #tpu.memory_space<vmem>>, vector<1024x128xbf16>
    %cst_5 = arith.constant dense<0.000000e+00> : vector<8x128xf32>
    %8 = tpu.matmul %6, %7, %cst_5 {dimension_numbers = #tpu.dot_dimension_numbers<[1], [0], [0], [1], [0, 0, 1, 1], [], []>} : vector<8x1024xbf16>, vector<1024x128xbf16>, vector<8x128xf32> -> vector<8x128xf32>
    %9 = tpu.iota {dimensions = array<i32: 1>} : vector<8x128xi32>
    %c10_i32 = arith.constant 10 : i32
    %10 = vector.broadcast %c10_i32 : i32 to vector<8x128xi32>
    %11 = arith.cmpi slt, %9, %10 : vector<8x128xi32>
    %cst_6 = arith.constant -1.000000e+30 : f32
    %12 = vector.broadcast %cst_6 : f32 to vector<8x128xf32>
    %13 = arith.select %11, %8, %12 : vector<8x128xi1>, vector<8x128xf32>
    %cst_7 = arith.constant dense<0xFF800000> : vector<8xf32>
    %14 = vector.multi_reduction <maximumf>, %13, %cst_7 [1] : vector<8x128xf32> to vector<8xf32>
    %15 = vector.shape_cast %14 : vector<8xf32> to vector<8x1xf32>
    %16 = vector.broadcast %15 : vector<8x1xf32> to vector<8x128xf32>
    %17 = arith.subf %13, %16 : vector<8x128xf32>
    %18 = math.exp %17 : vector<8x128xf32>
    %cst_8 = arith.constant dense<0.000000e+00> : vector<8xf32>
    %19 = vector.multi_reduction <add>, %18, %cst_8 [1] : vector<8x128xf32> to vector<8xf32>
    %20 = vector.shape_cast %19 : vector<8xf32> to vector<8x1xf32>
    %21 = math.log %20 : vector<8x1xf32>
    %22 = vector.broadcast %21 : vector<8x1xf32> to vector<8x128xf32>
    %23 = arith.subf %17, %22 : vector<8x128xf32>
    %c0_9 = arith.constant 0 : index
    %c0_10 = arith.constant 0 : index
    %24 = vector.load %arg3[%c0_9, %c0_10] : memref<8x128xf32, #tpu.memory_space<vmem>>, vector<8x128xf32>
    tpu.vector_store %arg3[%c0_9, %c0_10], %23 {strides = array<i32>} : memref<8x128xf32, #tpu.memory_space<vmem>>, vector<8x128xf32>,
    return
  }
  func.func @transform_0(%arg0: i32) -> (i32, i32) {
    %c0_i32 = arith.constant 0 : i32
    %c0_i32_0 = arith.constant 0 : i32
    return %arg0, %c0_i32 : i32, i32
  }
  func.func @transform_1(%arg0: i32) -> (i32, i32) {
    %c0_i32 = arith.constant 0 : i32
    %c0_i32_0 = arith.constant 0 : i32
    %c0_i32_1 = arith.constant 0 : i32
    return %c0_i32, %c0_i32_0 : i32, i32
  }
  func.func @transform_2(%arg0: i32) -> (i32, i32) {
    %c0_i32 = arith.constant 0 : i32
    %c0_i32_0 = arith.constant 0 : i32
    return %arg0, %c0_i32 : i32, i32
  }
}

</mosaic_0001>

<llo_original>
// kernel: tpu_custom_call.1
$region0: #{tpu_custom_call.1}
  #allocation0 [shape = 'u32[]', space=smem, size = 0x4, offset = 0x4, fixed_abs, tag = 'smem constant byte address 0x4 - core index']
  #allocation1 [shape = 'u32[144,128]{1,0:T(1,128)}', space=vmem, size = 0x12000, scoped, tag = 'internal scratch']
  %s0 = inlined_call_operand.hbm [shape: f32[2,1024], index: 0, kind: input, shape index: {}]
  %s1 = inlined_call_operand.hbm [shape: bf16[1024,128], index: 1, kind: input, shape index: {}]
  %s2 = inlined_call_operand.hbm [shape: f32[2,128], index: 2, kind: output, shape index: {}]
  %s3 = sld [smem:[#allocation0]]
  $region26: #{tpu_custom_call.1} parent=0
    _
  %s5 = ssub.s32 1, %s3
  %s6 = scalar_select 0, %s5, %s3
  $region1: #{tpu_custom_call.1} parent=0
    #allocation2 [shape = 'u8[32768]{0}', space=vmem, size = 0x8000, scoped, tag = 'input window, operand 0, single buffered']
    #allocation3 [shape = 's32[1]{0}', space=sflag, size = 0x4, scoped, tag = 'scoped memory for tpu_custom_call.1']
    #allocation4 [shape = 's32[1]{0}', space=sflag, size = 0x4, scoped, tag = 'scoped memory for tpu_custom_call.1']
    #allocation5 [shape = 'u8[262144]{0}', space=vmem, size = 0x40000, scoped, tag = 'input window, operand 1, single buffered']
    #allocation6 [shape = 's32[1]{0}', space=sflag, size = 0x4, scoped, tag = 'scoped memory for tpu_custom_call.1']
    #allocation7 [shape = 'u8[4096]{0}', space=vmem, size = 0x1000, scoped, tag = 'output window, operand 0, single buffered']
    %7 = vsyncpa [#allocation3], 0
    %8 = vsyncpa [#allocation6], 0
    %9 = vsyncpa [#allocation4], 0
    // Predicated region
    $region2: #{tpu_custom_call.1} parent=1 // pred_check
      _
    $region3: #{tpu_custom_call.1} parent=1 // pred_check_branch
      %11 = sbr.rel (0) target = $region5
    $region4: #{tpu_custom_call.1} parent=1 // pred_region
      %s13 = ssub.s32 1024, 256
      %14 = vsyncadd [#allocation3], %s13
      %s15 = sshll.u32 [#allocation2], 4
      %s16 = int_to_ptr.vmem [resolvable:$true] %s15
      %21 = dma.hbm_to_vmem [thread:$0]  %s0, 256, %s16, [#allocation3], 256, 256, 16
    $region5: #{tpu_custom_call.1} parent=1 // pred_fallthru
      _
    // Predicated region
    $region6: #{tpu_custom_call.1} parent=1 // pred_check
      _
    $region7: #{tpu_custom_call.1} parent=1 // pred_check_branch
      %23 = sbr.rel (0) target = $region9
    $region8: #{tpu_custom_call.1} parent=1 // pred_region
      %s25 = ssub.s32 8192, 8192
      %26 = vsyncadd [#allocation6], %s25
      %s27 = sshll.u32 [#allocation5], 4
      %s28 = int_to_ptr.vmem [resolvable:$true] %s27
      %33 = dma.hbm_to_vmem [thread:$0]  %s1, 8192, %s28, [#allocation6], 64, 64, 4
    $region9: #{tpu_custom_call.1} parent=1 // pred_fallthru
      _
    // Predicated region
    $region10: #{tpu_custom_call.1} parent=1 // pred_check
      _
    $region11: #{tpu_custom_call.1} parent=1 // pred_check_branch
      %35 = sbr.rel (0) target = $region13
    $region12: #{tpu_custom_call.1} parent=1 // pred_region
      %36 = dma.done [#allocation3], 1024
    $region13: #{tpu_custom_call.1} parent=1 // pred_fallthru
      _
    // Predicated region
    $region14: #{tpu_custom_call.1} parent=1 // pred_check
      _
    $region15: #{tpu_custom_call.1} parent=1 // pred_check_branch
      %38 = sbr.rel (0) target = $region17
    $region16: #{tpu_custom_call.1} parent=1 // pred_region
      %39 = dma.done [#allocation6], 8192
    $region17: #{tpu_custom_call.1} parent=1 // pred_fallthru
      _
    %v41 = vld [vmem:[#allocation2] sm:$0xff]
    %v42 = vld [vmem:[#allocation2 + $0x8] sm:$0xff]
    %v43 = vld [vmem:[#allocation2 + $0x10] sm:$0xff]
    %v44 = vld [vmem:[#allocation2 + $0x18] sm:$0xff]
    %v45 = vld [vmem:[#allocation2 + $0x20] sm:$0xff]
    %v46 = vld [vmem:[#allocation2 + $0x28] sm:$0xff]
    %v47 = vld [vmem:[#allocation2 + $0x30] sm:$0xff]
    %v48 = vld [vmem:[#allocation2 + $0x38] sm:$0xff]
    %vm49 = vcmp.lt.f32.partialorder %v41, 0.0
    %vm50 = vcmp.lt.f32.partialorder %v42, 0.0
    %vm51 = vcmp.lt.f32.partialorder %v43, 0.0
    %vm52 = vcmp.lt.f32.partialorder %v44, 0.0
    %vm53 = vcmp.lt.f32.partialorder %v45, 0.0
    %vm54 = vcmp.lt.f32.partialorder %v46, 0.0
    %vm55 = vcmp.lt.f32.partialorder %v47, 0.0
    %vm56 = vcmp.lt.f32.partialorder %v48, 0.0
    %v57 = vsel %vm49, -1.0, 1.0
    %v58 = vsel %vm50, -1.0, 1.0
    %v59 = vsel %vm51, -1.0, 1.0
    %v60 = vsel %vm52, -1.0, 1.0
    %v61 = vsel %vm53, -1.0, 1.0
    %v62 = vsel %vm54, -1.0, 1.0
    %v63 = vsel %vm55, -1.0, 1.0
    %v64 = vsel %vm56, -1.0, 1.0
    %v73 = vcombine.low %v57, %v59
    %v74 = vcombine.high %v57, %v59
    %v75 = vcombine.low %v61, %v63
    %v76 = vcombine.high %v61, %v63
    %v78 = vunpack.c.l.s4 1983009808
    %v79 = vunpack.c.0.s8 %v78
    %v80 = vlaneseq
    %v81 = vshrl.u32 %v80, 7
    %v82 = vsub.s32 %v79, %v81
    %v83 = vrot.slane %v73, %v82
    %v85 = vunpack.c.l.s4 1983009808
    %v86 = vunpack.c.0.s8 %v85
    %v87 = vlaneseq
    %v88 = vshrl.u32 %v87, 7
    %v89 = vsub.s32 %v86, %v88
    %v90 = vrot.slane %v74, %v89
    %v92 = vunpack.c.l.s4 1983009808
    %v93 = vunpack.c.0.s8 %v92
    %v94 = vlaneseq
    %v95 = vshrl.u32 %v94, 7
    %v96 = vsub.s32 %v93, %v95
    %v97 = vrot.slane %v75, %v96
    %v99 = vunpack.c.l.s4 1983009808
    %v100 = vunpack.c.0.s8 %v99
    %v101 = vlaneseq
    %v102 = vshrl.u32 %v101, 7
    %v103 = vsub.s32 %v100, %v102
    %v104 = vrot.slane %v76, %v103
    %v105 = vcombine.low %v83, %v97
    %v106 = vcombine.high %v83, %v97
    %v107 = vcombine.low %v90, %v104
    %v108 = vcombine.high %v90, %v104
    %v109 = vcombine.low %v58, %v60
    %v110 = vcombine.high %v58, %v60
    %v111 = vcombine.low %v62, %v64
    %v112 = vcombine.high %v62, %v64
    %v114 = vunpack.c.l.s4 1983009808
    %v115 = vunpack.c.0.s8 %v114
    %v116 = vlaneseq
    %v117 = vshrl.u32 %v116, 7
    %v118 = vsub.s32 %v115, %v117
    %v119 = vrot.slane %v109, %v118
    %v121 = vunpack.c.l.s4 1983009808
    %v122 = vunpack.c.0.s8 %v121
    %v123 = vlaneseq
    %v124 = vshrl.u32 %v123, 7
    %v125 = vsub.s32 %v122, %v124
    %v126 = vrot.slane %v110, %v125
    %v128 = vunpack.c.l.s4 1983009808
    %v129 = vunpack.c.0.s8 %v128
    %v130 = vlaneseq
    %v131 = vshrl.u32 %v130, 7
    %v132 = vsub.s32 %v129, %v131
    %v133 = vrot.slane %v111, %v132
    %v135 = vunpack.c.l.s4 1983009808
    %v136 = vunpack.c.0.s8 %v135
    %v137 = vlaneseq
    %v138 = vshrl.u32 %v137, 7
    %v139 = vsub.s32 %v136, %v138
    %v140 = vrot.slane %v112, %v139
    %v141 = vcombine.low %v119, %v133
    %v142 = vcombine.high %v119, %v133
    %v143 = vcombine.low %v126, %v140
    %v144 = vcombine.high %v126, %v140
    %v153 = vpack.c.bf16 %v105, %v105
    %v154 = vpack.c.bf16 %v106, %v106
    %v155 = vpack.c.bf16 %v107, %v107
    %v156 = vpack.c.bf16 %v108, %v108
    %v157 = vpack.c.bf16 %v141, %v141
    %v158 = vpack.c.bf16 %v142, %v142
    %v159 = vpack.c.bf16 %v143, %v143
    %v160 = vpack.c.bf16 %v144, %v144
    %v161 = vld [vmem:[#allocation5] sm:$0xf]
    %v162 = vld [vmem:[#allocation5 + $0x4] sm:$0xf]
    %v163 = vld [vmem:[#allocation5 + $0x8] sm:$0xf]
    %v164 = vld [vmem:[#allocation5 + $0xc] sm:$0xf]
    %v165 = vld [vmem:[#allocation5 + $0x10] sm:$0xf]
    %v166 = vld [vmem:[#allocation5 + $0x14] sm:$0xf]
    %v167 = vld [vmem:[#allocation5 + $0x18] sm:$0xf]
    %v168 = vld [vmem:[#allocation5 + $0x1c] sm:$0xf]
    %v169 = vld [vmem:[#allocation5 + $0x20] sm:$0xf]
    %v170 = vld [vmem:[#allocation5 + $0x24] sm:$0xf]
    %v171 = vld [vmem:[#allocation5 + $0x28] sm:$0xf]
    %v172 = vld [vmem:[#allocation5 + $0x2c] sm:$0xf]
    %v173 = vld [vmem:[#allocation5 + $0x30] sm:$0xf]
    %v174 = vld [vmem:[#allocation5 + $0x34] sm:$0xf]
    %v175 = vld [vmem:[#allocation5 + $0x38] sm:$0xf]
    %v176 = vld [vmem:[#allocation5 + $0x3c] sm:$0xf]
    %v177 = vld [vmem:[#allocation5 + $0x40] sm:$0xf]
    %v178 = vld [vmem:[#allocation5 + $0x44] sm:$0xf]
    %v179 = vld [vmem:[#allocation5 + $0x48] sm:$0xf]
    %v180 = vld [vmem:[#allocation5 + $0x4c] sm:$0xf]
    %v181 = vld [vmem:[#allocation5 + $0x50] sm:$0xf]
    %v182 = vld [vmem:[#allocation5 + $0x54] sm:$0xf]
    %v183 = vld [vmem:[#allocation5 + $0x58] sm:$0xf]
    %v184 = vld [vmem:[#allocation5 + $0x5c] sm:$0xf]
    %v185 = vld [vmem:[#allocation5 + $0x60] sm:$0xf]
    %v186 = vld [vmem:[#allocation5 + $0x64] sm:$0xf]
    %v187 = vld [vmem:[#allocation5 + $0x68] sm:$0xf]
    %v188 = vld [vmem:[#allocation5 + $0x6c] sm:$0xf]
    %v189 = vld [vmem:[#allocation5 + $0x70] sm:$0xf]
    %v190 = vld [vmem:[#allocation5 + $0x74] sm:$0xf]
    %v191 = vld [vmem:[#allocation5 + $0x78] sm:$0xf]
    %v192 = vld [vmem:[#allocation5 + $0x7c] sm:$0xf]
    %v193 = vld [vmem:[#allocation5 + $0x80] sm:$0xf]
    %v194 = vld [vmem:[#allocation5 + $0x84] sm:$0xf]
    %v195 = vld [vmem:[#allocation5 + $0x88] sm:$0xf]
    %v196 = vld [vmem:[#allocation5 + $0x8c] sm:$0xf]
    %v197 = vld [vmem:[#allocation5 + $0x90] sm:$0xf]
    %v198 = vld [vmem:[#allocation5 + $0x94] sm:$0xf]
    %v199 = vld [vmem:[#allocation5 + $0x98] sm:$0xf]
    %v200 = vld [vmem:[#allocation5 + $0x9c] sm:$0xf]
    %v201 = vld [vmem:[#allocation5 + $0xa0] sm:$0xf]
    %v202 = vld [vmem:[#allocation5 + $0xa4] sm:$0xf]
    %v203 = vld [vmem:[#allocation5 + $0xa8] sm:$0xf]
    %v204 = vld [vmem:[#allocation5 + $0xac] sm:$0xf]
    %v205 = vld [vmem:[#allocation5 + $0xb0] sm:$0xf]
    %v206 = vld [vmem:[#allocation5 + $0xb4] sm:$0xf]
    %v207 = vld [vmem:[#allocation5 + $0xb8] sm:$0xf]
    %v208 = vld [vmem:[#allocation5 + $0xbc] sm:$0xf]
    %v209 = vld [vmem:[#allocation5 + $0xc0] sm:$0xf]
    %v210 = vld [vmem:[#allocation5 + $0xc4] sm:$0xf]
    %v211 = vld [vmem:[#allocation5 + $0xc8] sm:$0xf]
    %v212 = vld [vmem:[#allocation5 + $0xcc] sm:$0xf]
    %v213 = vld [vmem:[#allocation5 + $0xd0] sm:$0xf]
    %v214 = vld [vmem:[#allocation5 + $0xd4] sm:$0xf]
    %v215 = vld [vmem:[#allocation5 + $0xd8] sm:$0xf]
    %v216 = vld [vmem:[#allocation5 + $0xdc] sm:$0xf]
    %v217 = vld [vmem:[#allocation5 + $0xe0] sm:$0xf]
    %v218 = vld [vmem:[#allocation5 + $0xe4] sm:$0xf]
    %v219 = vld [vmem:[#allocation5 + $0xe8] sm:$0xf]
    %v220 = vld [vmem:[#allocation5 + $0xec] sm:$0xf]
    %v221 = vld [vmem:[#allocation5 + $0xf0] sm:$0xf]
    %v222 = vld [vmem:[#allocation5 + $0xf4] sm:$0xf]
    %v223 = vld [vmem:[#allocation5 + $0xf8] sm:$0xf]
    %v224 = vld [vmem:[#allocation5 + $0xfc] sm:$0xf]
    %v225 = vld [vmem:[#allocation5 + $0x100] sm:$0xf]
    %v226 = vld [vmem:[#allocation5 + $0x104] sm:$0xf]
    %v227 = vld [vmem:[#allocation5 + $0x108] sm:$0xf]
    %v228 = vld [vmem:[#allocation5 + $0x10c] sm:$0xf]
    %v229 = vld [vmem:[#allocation5 + $0x110] sm:$0xf]
    %v230 = vld [vmem:[#allocation5 + $0x114] sm:$0xf]
    %v231 = vld [vmem:[#allocation5 + $0x118] sm:$0xf]
    %v232 = vld [vmem:[#allocation5 + $0x11c] sm:$0xf]
    %v233 = vld [vmem:[#allocation5 + $0x120] sm:$0xf]
    %v234 = vld [vmem:[#allocation5 + $0x124] sm:$0xf]
    %v235 = vld [vmem:[#allocation5 + $0x128] sm:$0xf]
    %v236 = vld [vmem:[#allocation5 + $0x12c] sm:$0xf]
    %v237 = vld [vmem:[#allocation5 + $0x130] sm:$0xf]
    %v238 = vld [vmem:[#allocation5 + $0x134] sm:$0xf]
    %v239 = vld [vmem:[#allocation5 + $0x138] sm:$0xf]
    %v240 = vld [vmem:[#allocation5 + $0x13c] sm:$0xf]
    %v241 = vld [vmem:[#allocation5 + $0x140] sm:$0xf]
    %v242 = vld [vmem:[#allocation5 + $0x144] sm:$0xf]
    %v243 = vld [vmem:[#allocation5 + $0x148] sm:$0xf]
    %v244 = vld [vmem:[#allocation5 + $0x14c] sm:$0xf]
    %v245 = vld [vmem:[#allocation5 + $0x150] sm:$0xf]
    %v246 = vld [vmem:[#allocation5 + $0x154] sm:$0xf]
    %v247 = vld [vmem:[#allocation5 + $0x158] sm:$0xf]
    %v248 = vld [vmem:[#allocation5 + $0x15c] sm:$0xf]
    %v249 = vld [vmem:[#allocation5 + $0x160] sm:$0xf]
    %v250 = vld [vmem:[#allocation5 + $0x164] sm:$0xf]
    %v251 = vld [vmem:[#allocation5 + $0x168] sm:$0xf]
    %v252 = vld [vmem:[#allocation5 + $0x16c] sm:$0xf]
    %v253 = vld [vmem:[#allocation5 + $0x170] sm:$0xf]
    %v254 = vld [vmem:[#allocation5 + $0x174] sm:$0xf]
    %v255 = vld [vmem:[#allocation5 + $0x178] sm:$0xf]
    %v256 = vld [vmem:[#allocation5 + $0x17c] sm:$0xf]
    %v257 = vld [vmem:[#allocation5 + $0x180] sm:$0xf]
    %v258 = vld [vmem:[#allocation5 + $0x184] sm:$0xf]
    %v259 = vld [vmem:[#allocation5 + $0x188] sm:$0xf]
    %v260 = vld [vmem:[#allocation5 + $0x18c] sm:$0xf]
    %v261 = vld [vmem:[#allocation5 + $0x190] sm:$0xf]
    %v262 = vld [vmem:[#allocation5 + $0x194] sm:$0xf]
    %v263 = vld [vmem:[#allocation5 + $0x198] sm:$0xf]
    %v264 = vld [vmem:[#allocation5 + $0x19c] sm:$0xf]
    %v265 = vld [vmem:[#allocation5 + $0x1a0] sm:$0xf]
    %v266 = vld [vmem:[#allocation5 + $0x1a4] sm:$0xf]
    %v267 = vld [vmem:[#allocation5 + $0x1a8] sm:$0xf]
    %v268 = vld [vmem:[#allocation5 + $0x1ac] sm:$0xf]
    %v269 = vld [vmem:[#allocation5 + $0x1b0] sm:$0xf]
    %v270 = vld [vmem:[#allocation5 + $0x1b4] sm:$0xf]
    %v271 = vld [vmem:[#allocation5 + $0x1b8] sm:$0xf]
    %v272 = vld [vmem:[#allocation5 + $0x1bc] sm:$0xf]
    %v273 = vld [vmem:[#allocation5 + $0x1c0] sm:$0xf]
    %v274 = vld [vmem:[#allocation5 + $0x1c4] sm:$0xf]
    %v275 = vld [vmem:[#allocation5 + $0x1c8] sm:$0xf]
    %v276 = vld [vmem:[#allocation5 + $0x1cc] sm:$0xf]
    %v277 = vld [vmem:[#allocation5 + $0x1d0] sm:$0xf]
    %v278 = vld [vmem:[#allocation5 + $0x1d4] sm:$0xf]
    %v279 = vld [vmem:[#allocation5 + $0x1d8] sm:$0xf]
    %v280 = vld [vmem:[#allocation5 + $0x1dc] sm:$0xf]
    %v281 = vld [vmem:[#allocation5 + $0x1e0] sm:$0xf]
    %v282 = vld [vmem:[#allocation5 + $0x1e4] sm:$0xf]
    %v283 = vld [vmem:[#allocation5 + $0x1e8] sm:$0xf]
    %v284 = vld [vmem:[#allocation5 + $0x1ec] sm:$0xf]
    %v285 = vld [vmem:[#allocation5 + $0x1f0] sm:$0xf]
    %v286 = vld [vmem:[#allocation5 + $0x1f4] sm:$0xf]
    %v287 = vld [vmem:[#allocation5 + $0x1f8] sm:$0xf]
    %v288 = vld [vmem:[#allocation5 + $0x1fc] sm:$0xf]
    %v417 = vunpack.c.l.b16 %v161
    %v418 = vunpack.c.l.b16 %v162
    %v419 = vunpack.c.l.b16 %v163
    %v420 = vunpack.c.l.b16 %v164
    %v421 = vunpack.c.l.b16 %v165
    %v422 = vunpack.c.l.b16 %v166
    %v423 = vunpack.c.l.b16 %v167
    %v424 = vunpack.c.l.b16 %v168
    %v425 = vunpack.c.l.b16 %v169
    %v426 = vunpack.c.l.b16 %v170
    %v427 = vunpack.c.l.b16 %v171
    %v428 = vunpack.c.l.b16 %v172
    %v429 = vunpack.c.l.b16 %v173
    %v430 = vunpack.c.l.b16 %v174
    %v431 = vunpack.c.l.b16 %v175
    %v432 = vunpack.c.l.b16 %v176
    %v433 = vunpack.c.l.b16 %v177
    %v434 = vunpack.c.l.b16 %v178
    %v435 = vunpack.c.l.b16 %v179
    %v436 = vunpack.c.l.b16 %v180
    %v437 = vunpack.c.l.b16 %v181
    %v438 = vunpack.c.l.b16 %v182
    %v439 = vunpack.c.l.b16 %v183
    %v440 = vunpack.c.l.b16 %v184
    %v441 = vunpack.c.l.b16 %v185
    %v442 = vunpack.c.l.b16 %v186
    %v443 = vunpack.c.l.b16 %v187
    %v444 = vunpack.c.l.b16 %v188
    %v445 = vunpack.c.l.b16 %v189
    %v446 = vunpack.c.l.b16 %v190
    %v447 = vunpack.c.l.b16 %v191
    %v448 = vunpack.c.l.b16 %v192
    %v449 = vunpack.c.l.b16 %v193
    %v450 = vunpack.c.l.b16 %v194
    %v451 = vunpack.c.l.b16 %v195
    %v452 = vunpack.c.l.b16 %v196
    %v453 = vunpack.c.l.b16 %v197
    %v454 = vunpack.c.l.b16 %v198
    %v455 = vunpack.c.l.b16 %v199
    %v456 = vunpack.c.l.b16 %v200
    %v457 = vunpack.c.l.b16 %v201
    %v458 = vunpack.c.l.b16 %v202
    %v459 = vunpack.c.l.b16 %v203
    %v460 = vunpack.c.l.b16 %v204
    %v461 = vunpack.c.l.b16 %v205
    %v462 = vunpack.c.l.b16 %v206
    %v463 = vunpack.c.l.b16 %v207
    %v464 = vunpack.c.l.b16 %v208
    %v465 = vunpack.c.l.b16 %v209
    %v466 = vunpack.c.l.b16 %v210
    %v467 = vunpack.c.l.b16 %v211
    %v468 = vunpack.c.l.b16 %v212
    %v469 = vunpack.c.l.b16 %v213
    %v470 = vunpack.c.l.b16 %v214
    %v471 = vunpack.c.l.b16 %v215
    %v472 = vunpack.c.l.b16 %v216
    %v473 = vunpack.c.l.b16 %v217
    %v474 = vunpack.c.l.b16 %v218
    %v475 = vunpack.c.l.b16 %v219
    %v476 = vunpack.c.l.b16 %v220
    %v477 = vunpack.c.l.b16 %v221
    %v478 = vunpack.c.l.b16 %v222
    %v479 = vunpack.c.l.b16 %v223
    %v480 = vunpack.c.l.b16 %v224
    %v481 = vunpack.c.l.b16 %v225
    %v482 = vunpack.c.l.b16 %v226
    %v483 = vunpack.c.l.b16 %v227
    %v484 = vunpack.c.l.b16 %v228
    %v485 = vunpack.c.l.b16 %v229
    %v486 = vunpack.c.l.b16 %v230
    %v487 = vunpack.c.l.b16 %v231
    %v488 = vunpack.c.l.b16 %v232
    %v489 = vunpack.c.l.b16 %v233
    %v490 = vunpack.c.l.b16 %v234
    %v491 = vunpack.c.l.b16 %v235
    %v492 = vunpack.c.l.b16 %v236
    %v493 = vunpack.c.l.b16 %v237
    %v494 = vunpack.c.l.b16 %v238
    %v495 = vunpack.c.l.b16 %v239
    %v496 = vunpack.c.l.b16 %v240
    %v497 = vunpack.c.l.b16 %v241
    %v498 = vunpack.c.l.b16 %v242
    %v499 = vunpack.c.l.b16 %v243
    %v500 = vunpack.c.l.b16 %v244
    %v501 = vunpack.c.l.b16 %v245
    %v502 = vunpack.c.l.b16 %v246
    %v503 = vunpack.c.l.b16 %v247
    %v504 = vunpack.c.l.b16 %v248
    %v505 = vunpack.c.l.b16 %v249
    %v506 = vunpack.c.l.b16 %v250
    %v507 = vunpack.c.l.b16 %v251
    %v508 = vunpack.c.l.b16 %v252
    %v509 = vunpack.c.l.b16 %v253
    %v510 = vunpack.c.l.b16 %v254
    %v511 = vunpack.c.l.b16 %v255
    %v512 = vunpack.c.l.b16 %v256
    %v513 = vunpack.c.l.b16 %v257
    %v514 = vunpack.c.l.b16 %v258
    %v515 = vunpack.c.l.b16 %v259
    %v516 = vunpack.c.l.b16 %v260
    %v517 = vunpack.c.l.b16 %v261
    %v518 = vunpack.c.l.b16 %v262
    %v519 = vunpack.c.l.b16 %v263
    %v520 = vunpack.c.l.b16 %v264
    %v521 = vunpack.c.l.b16 %v265
    %v522 = vunpack.c.l.b16 %v266
    %v523 = vunpack.c.l.b16 %v267
    %v524 = vunpack.c.l.b16 %v268
    %v525 = vunpack.c.l.b16 %v269
    %v526 = vunpack.c.l.b16 %v270
    %v527 = vunpack.c.l.b16 %v271
    %v528 = vunpack.c.l.b16 %v272
    %v529 = vunpack.c.l.b16 %v273
    %v530 = vunpack.c.l.b16 %v274
    %v531 = vunpack.c.l.b16 %v275
    %v532 = vunpack.c.l.b16 %v276
    %v533 = vunpack.c.l.b16 %v277
    %v534 = vunpack.c.l.b16 %v278
    %v535 = vunpack.c.l.b16 %v279
    %v536 = vunpack.c.l.b16 %v280
    %v537 = vunpack.c.l.b16 %v281
    %v538 = vunpack.c.l.b16 %v282
    %v539 = vunpack.c.l.b16 %v283
    %v540 = vunpack.c.l.b16 %v284
    %v541 = vunpack.c.l.b16 %v285
    %v542 = vunpack.c.l.b16 %v286
    %v543 = vunpack.c.l.b16 %v287
    %v544 = vunpack.c.l.b16 %v288
    %v545 = vpack.c.b16 %v418, %v417
    %v546 = vpack.c.b16 %v420, %v419
    %v547 = vpack.c.b16 %v422, %v421
    %v548 = vpack.c.b16 %v424, %v423
    %v549 = vpack.c.b16 %v426, %v425
    %v550 = vpack.c.b16 %v428, %v427
    %v551 = vpack.c.b16 %v430, %v429
    %v552 = vpack.c.b16 %v432, %v431
    %v553 = vpack.c.b16 %v434, %v433
    %v554 = vpack.c.b16 %v436, %v435
    %v555 = vpack.c.b16 %v438, %v437
    %v556 = vpack.c.b16 %v440, %v439
    %v557 = vpack.c.b16 %v442, %v441
    %v558 = vpack.c.b16 %v444, %v443
    %v559 = vpack.c.b16 %v446, %v445
    %v560 = vpack.c.b16 %v448, %v447
    %v561 = vpack.c.b16 %v450, %v449
    %v562 = vpack.c.b16 %v452, %v451
    %v563 = vpack.c.b16 %v454, %v453
    %v564 = vpack.c.b16 %v456, %v455
    %v565 = vpack.c.b16 %v458, %v457
    %v566 = vpack.c.b16 %v460, %v459
    %v567 = vpack.c.b16 %v462, %v461
    %v568 = vpack.c.b16 %v464, %v463
    %v569 = vpack.c.b16 %v466, %v465
    %v570 = vpack.c.b16 %v468, %v467
    %v571 = vpack.c.b16 %v470, %v469
    %v572 = vpack.c.b16 %v472, %v471
    %v573 = vpack.c.b16 %v474, %v473
    %v574 = vpack.c.b16 %v476, %v475
    %v575 = vpack.c.b16 %v478, %v477
    %v576 = vpack.c.b16 %v480, %v479
    %v577 = vpack.c.b16 %v482, %v481
    %v578 = vpack.c.b16 %v484, %v483
    %v579 = vpack.c.b16 %v486, %v485
    %v580 = vpack.c.b16 %v488, %v487
    %v581 = vpack.c.b16 %v490, %v489
    %v582 = vpack.c.b16 %v492, %v491
    %v583 = vpack.c.b16 %v494, %v493
    %v584 = vpack.c.b16 %v496, %v495
    %v585 = vpack.c.b16 %v498, %v497
    %v586 = vpack.c.b16 %v500, %v499
    %v587 = vpack.c.b16 %v502, %v501
    %v588 = vpack.c.b16 %v504, %v503
    %v589 = vpack.c.b16 %v506, %v505
    %v590 = vpack.c.b16 %v508, %v507
    %v591 = vpack.c.b16 %v510, %v509
    %v592 = vpack.c.b16 %v512, %v511
    %v593 = vpack.c.b16 %v514, %v513
    %v594 = vpack.c.b16 %v516, %v515
    %v595 = vpack.c.b16 %v518, %v517
    %v596 = vpack.c.b16 %v520, %v519
    %v597 = vpack.c.b16 %v522, %v521
    %v598 = vpack.c.b16 %v524, %v523
    %v599 = vpack.c.b16 %v526, %v525
    %v600 = vpack.c.b16 %v528, %v527
    %v601 = vpack.c.b16 %v530, %v529
    %v602 = vpack.c.b16 %v532, %v531
    %v603 = vpack.c.b16 %v534, %v533
    %v604 = vpack.c.b16 %v536, %v535
    %v605 = vpack.c.b16 %v538, %v537
    %v606 = vpack.c.b16 %v540, %v539
    %v607 = vpack.c.b16 %v542, %v541
    %v608 = vpack.c.b16 %v544, %v543
    %673 = vmatprep.subr.bf16.mxu0 0
    %674 = vmatpush1.bf16.msra.mxu0 %v552
    %675 = vmatprep.subr.bf16.mxu0 0
    %676 = vmatpush1.bf16.msra.mxu0 %v551
    %677 = vmatprep.subr.bf16.mxu0 0
    %678 = vmatpush1.bf16.msra.mxu0 %v550
    %679 = vmatprep.subr.bf16.mxu0 0
    %680 = vmatpush1.bf16.msra.mxu0 %v549
    %681 = vmatprep.subr.bf16.mxu0 0
    %682 = vmatpush1.bf16.msra.mxu0 %v548
    %683 = vmatprep.subr.bf16.mxu0 0
    %684 = vmatpush1.bf16.msra.mxu0 %v547
    %685 = vmatprep.subr.bf16.mxu0 0
    %686 = vmatpush1.bf16.msra.mxu0 %v546
    %687 = vmatprep.subr.bf16.mxu0 0
    %688 = vmatpush1.bf16.msra.mxu0 %v545
    %689 = vmatprep.subr.bf16.mxu0 0
    %690 = vmatpush2.bf16.msra.mxu0 %v560
    %691 = vmatprep.subr.bf16.mxu0 0
    %692 = vmatpush2.bf16.msra.mxu0 %v559
    %693 = vmatprep.subr.bf16.mxu0 0
    %694 = vmatpush2.bf16.msra.mxu0 %v558
    %695 = vmatprep.subr.bf16.mxu0 0
    %696 = vmatpush2.bf16.msra.mxu0 %v557
    %697 = vmatprep.subr.bf16.mxu0 0
    %698 = vmatpush2.bf16.msra.mxu0 %v556
    %699 = vmatprep.subr.bf16.mxu0 0
    %700 = vmatpush2.bf16.msra.mxu0 %v555
    %701 = vmatprep.subr.bf16.mxu0 0
    %702 = vmatpush2.bf16.msra.mxu0 %v554
    %703 = vmatprep.subr.bf16.mxu0 0
    %704 = vmatpush2.bf16.msra.mxu0 %v553
    %705 = vmatprep.mubr.bf16.mxu0 %v154
    %706 = vmatmul.mubr.bf16.gmra.mxu0 %v153
    %v707 = vpop.f32.mrf.mxu0
    %v708 = vadd.f32 0.0, %v707
    %v709 = vpop.f32.mrf.mxu0
    %v710 = vpop.f32.mrf.mxu0
    %v711 = vpop.f32.mrf.mxu0
    %712 = vdwg.mxu0
    %713 = vmatprep.subr.bf16.mxu0 0
    %714 = vmatpush1.bf16.msra.mxu0 %v568
    %715 = vmatprep.subr.bf16.mxu0 0
    %716 = vmatpush1.bf16.msra.mxu0 %v567
    %717 = vmatprep.subr.bf16.mxu0 0
    %718 = vmatpush1.bf16.msra.mxu0 %v566
    %719 = vmatprep.subr.bf16.mxu0 0
    %720 = vmatpush1.bf16.msra.mxu0 %v565
    %721 = vmatprep.subr.bf16.mxu0 0
    %722 = vmatpush1.bf16.msra.mxu0 %v564
    %723 = vmatprep.subr.bf16.mxu0 0
    %724 = vmatpush1.bf16.msra.mxu0 %v563
    %725 = vmatprep.subr.bf16.mxu0 0
    %726 = vmatpush1.bf16.msra.mxu0 %v562
    %727 = vmatprep.subr.bf16.mxu0 0
    %728 = vmatpush1.bf16.msra.mxu0 %v561
    %729 = vmatprep.subr.bf16.mxu0 0
    %730 = vmatpush2.bf16.msra.mxu0 %v576
    %731 = vmatprep.subr.bf16.mxu0 0
    %732 = vmatpush2.bf16.msra.mxu0 %v575
    %733 = vmatprep.subr.bf16.mxu0 0
    %734 = vmatpush2.bf16.msra.mxu0 %v574
    %735 = vmatprep.subr.bf16.mxu0 0
    %736 = vmatpush2.bf16.msra.mxu0 %v573
    %737 = vmatprep.subr.bf16.mxu0 0
    %738 = vmatpush2.bf16.msra.mxu0 %v572
    %739 = vmatprep.subr.bf16.mxu0 0
    %740 = vmatpush2.bf16.msra.mxu0 %v571
    %741 = vmatprep.subr.bf16.mxu0 0
    %742 = vmatpush2.bf16.msra.mxu0 %v570
    %743 = vmatprep.subr.bf16.mxu0 0
    %744 = vmatpush2.bf16.msra.mxu0 %v569
    %745 = vmatprep.mubr.bf16.mxu0 %v156
    %746 = vmatmul.mubr.bf16.gmra.mxu0 %v155
    %v747 = vpop.f32.mrf.mxu0
    %v748 = vadd.f32 %v708, %v747
    %v749 = vpop.f32.mrf.mxu0
    %v750 = vpop.f32.mrf.mxu0
    %v751 = vpop.f32.mrf.mxu0
    %752 = vdwg.mxu0
    %753 = vmatprep.subr.bf16.mxu0 0
    %754 = vmatpush1.bf16.msra.mxu0 %v584
    %755 = vmatprep.subr.bf16.mxu0 0
    %756 = vmatpush1.bf16.msra.mxu0 %v583
    %757 = vmatprep.subr.bf16.mxu0 0
    %758 = vmatpush1.bf16.msra.mxu0 %v582
    %759 = vmatprep.subr.bf16.mxu0 0
    %760 = vmatpush1.bf16.msra.mxu0 %v581
    %761 = vmatprep.subr.bf16.mxu0 0
    %762 = vmatpush1.bf16.msra.mxu0 %v580
    %763 = vmatprep.subr.bf16.mxu0 0
    %764 = vmatpush1.bf16.msra.mxu0 %v579
    %765 = vmatprep.subr.bf16.mxu0 0
    %766 = vmatpush1.bf16.msra.mxu0 %v578
    %767 = vmatprep.subr.bf16.mxu0 0
    %768 = vmatpush1.bf16.msra.mxu0 %v577
    %769 = vmatprep.subr.bf16.mxu0 0
    %770 = vmatpush2.bf16.msra.mxu0 %v592
    %771 = vmatprep.subr.bf16.mxu0 0
    %772 = vmatpush2.bf16.msra.mxu0 %v591
    %773 = vmatprep.subr.bf16.mxu0 0
    %774 = vmatpush2.bf16.msra.mxu0 %v590
    %775 = vmatprep.subr.bf16.mxu0 0
    %776 = vmatpush2.bf16.msra.mxu0 %v589
    %777 = vmatprep.subr.bf16.mxu0 0
    %778 = vmatpush2.bf16.msra.mxu0 %v588
    %779 = vmatprep.subr.bf16.mxu0 0
    %780 = vmatpush2.bf16.msra.mxu0 %v587
    %781 = vmatprep.subr.bf16.mxu0 0
    %782 = vmatpush2.bf16.msra.mxu0 %v586
    %783 = vmatprep.subr.bf16.mxu0 0
    %784 = vmatpush2.bf16.msra.mxu0 %v585
    %785 = vmatprep.mubr.bf16.mxu0 %v158
    %786 = vmatmul.mubr.bf16.gmra.mxu0 %v157
    %v787 = vpop.f32.mrf.mxu0
    %v788 = vadd.f32 %v748, %v787
    %v789 = vpop.f32.mrf.mxu0
    %v790 = vpop.f32.mrf.mxu0
    %v791 = vpop.f32.mrf.mxu0
    %792 = vdwg.mxu0
    %793 = vmatprep.subr.bf16.mxu0 0
    %794 = vmatpush1.bf16.msra.mxu0 %v600
    %795 = vmatprep.subr.bf16.mxu0 0
    %796 = vmatpush1.bf16.msra.mxu0 %v599
    %797 = vmatprep.subr.bf16.mxu0 0
    %798 = vmatpush1.bf16.msra.mxu0 %v598
    %799 = vmatprep.subr.bf16.mxu0 0
    %800 = vmatpush1.bf16.msra.mxu0 %v597
    %801 = vmatprep.subr.bf16.mxu0 0
    %802 = vmatpush1.bf16.msra.mxu0 %v596
    %803 = vmatprep.subr.bf16.mxu0 0
    %804 = vmatpush1.bf16.msra.mxu0 %v595
    %805 = vmatprep.subr.bf16.mxu0 0
    %806 = vmatpush1.bf16.msra.mxu0 %v594
    %807 = vmatprep.subr.bf16.mxu0 0
    %808 = vmatpush1.bf16.msra.mxu0 %v593
    %809 = vmatprep.subr.bf16.mxu0 0
    %810 = vmatpush2.bf16.msra.mxu0 %v608
    %811 = vmatprep.subr.bf16.mxu0 0
    %812 = vmatpush2.bf16.msra.mxu0 %v607
    %813 = vmatprep.subr.bf16.mxu0 0
    %814 = vmatpush2.bf16.msra.mxu0 %v606
    %815 = vmatprep.subr.bf16.mxu0 0
    %816 = vmatpush2.bf16.msra.mxu0 %v605
    %817 = vmatprep.subr.bf16.mxu0 0
    %818 = vmatpush2.bf16.msra.mxu0 %v604
    %819 = vmatprep.subr.bf16.mxu0 0
    %820 = vmatpush2.bf16.msra.mxu0 %v603
    %821 = vmatprep.subr.bf16.mxu0 0
    %822 = vmatpush2.bf16.msra.mxu0 %v602
    %823 = vmatprep.subr.bf16.mxu0 0
    %824 = vmatpush2.bf16.msra.mxu0 %v601
    %825 = vmatprep.mubr.bf16.mxu0 %v160
    %826 = vmatmul.mubr.bf16.gmra.mxu0 %v159
    %v827 = vpop.f32.mrf.mxu0
    %v828 = vadd.f32 %v788, %v827
    %v829 = vpop.f32.mrf.mxu0
    %v830 = vpop.f32.mrf.mxu0
    %v831 = vpop.f32.mrf.mxu0
    %832 = vdwg.mxu0
    %v833 = vlaneseq
    %v834 = vand.u32 %v833, 127
    %vm835 = vcmp.lt.s32.totalorder %v834, 10
    %v836 = vsel %vm835, %v828, -1e+30
    %837 = vmax.xlane.f32.xlu0 %v836
    %v838 = vpop.xlane.xlu0 %837
    %v839 = vsub.f32 %v836, %v838
    %v840 = vmul.f32 %v839, 1.442695
    %v841 = vpow.pop %v840
    %842 = vadd.xlane.f32.xlu0 %v841
    %v843 = vpop.xlane.xlu0 %842
    %v844 = vlog2.pop %v843
    %v845 = vmul.f32 %v844, 0.6931472
    %v846 = vsub.f32 %v839, %v845
    %847 = vst [vmem:[#allocation7] sm:$0xff] %v846
    // Predicated region
    $region18: #{tpu_custom_call.1} parent=1 // pred_check
      _
    $region19: #{tpu_custom_call.1} parent=1 // pred_check_branch
      %849 = sbr.rel (0) target = $region21
    $region20: #{tpu_custom_call.1} parent=1 // pred_region
      %s851 = ssub.s32 128, 32
      %852 = vsyncadd [#allocation4], %s851
      %s853 = sshll.u32 [#allocation7], 4
      %s854 = int_to_ptr.vmem [resolvable:$true] %s853
      %859 = dma.vmem_to_hbm [thread:$0]  %s854, 32, %s2, [#allocation4], 32, 32, 2
    $region21: #{tpu_custom_call.1} parent=1 // pred_fallthru
      _
    // Predicated region
    $region22: #{tpu_custom_call.1} parent=1 // pred_check
      _
    $region23: #{tpu_custom_call.1} parent=1 // pred_check_branch
      %861 = sbr.rel (0) target = $region25
    $region24: #{tpu_custom_call.1} parent=1 // pred_region
      %862 = dma.done [#allocation4], 128
    $region25: #{tpu_custom_call.1} parent=1 // pred_fallthru
      _
    %863 = vsyncpa [#allocation3], 1
    %864 = vsyncpa [#allocation6], 1
    %865 = vsyncpa [#allocation4], 1

</llo_original>
